<compile_context>
chip_gen: v5e
topology: v5e:2x2
jax: 0.10.0
libtpu: 0.0.40
codegen_flags: <defaults>
</compile_context>

<pallas_src>
import functools

import jax
import jax.numpy as jnp
from jax.experimental import pallas as pl
from jax.experimental.pallas import tpu as pltpu


# ----------------------------------------------------------------------------
# Parameter setup (equivalent to PositionalEncoding.__init__)
# ----------------------------------------------------------------------------
def make_positional_table(num_hiddens: int, max_len: int = 1000) -> jnp.ndarray:
    """Builds P with shape (1, max_len, num_hiddens), matching the torch code."""
    pos = jnp.arange(max_len, dtype=jnp.float32)[:, None]                    # (L, 1)
    div = jnp.power(
        10000.0,
        jnp.arange(0, num_hiddens, 2, dtype=jnp.float32) / num_hiddens,      # (H/2,)
    )
    X = pos / div                                                            # (L, H/2)
    P = jnp.zeros((1, max_len, num_hiddens), dtype=jnp.float32)
    P = P.at[:, :, 0::2].set(jnp.sin(X))
    P = P.at[:, :, 1::2].set(jnp.cos(X))
    return P


# ----------------------------------------------------------------------------
# Pallas kernels (blocks: x/out/u = (B, TILE), p = (1, TILE) broadcast over B)
# ----------------------------------------------------------------------------
def _add_pe_kernel(x_ref, p_ref, o_ref):
    x = x_ref[...].astype(jnp.float32) + p_ref[...].astype(jnp.float32)
    o_ref[...] = x.astype(o_ref.dtype)


def _add_pe_dropout_kernel(x_ref, p_ref, u_ref, o_ref, *, dropout_rate: float):
    x = x_ref[...].astype(jnp.float32) + p_ref[...].astype(jnp.float32)
    scale = jnp.float32(1.0 / (1.0 - dropout_rate))
    # u ~ U[0,1): keep with probability (1 - dropout_rate); fused select avoids
    # a bool->f32 cast and an extra vmul.
    keep = u_ref[...] >= jnp.float32(dropout_rate)
    o_ref[...] = jnp.where(keep, x * scale, jnp.float32(0.0)).astype(o_ref.dtype)


# ----------------------------------------------------------------------------
# Tile selection for the flattened (B, S*H) layout
# ----------------------------------------------------------------------------
def _choose_flat_tile(flat_len: int, batch: int, itemsize: int,
                      target_bytes: int = 1 << 20) -> int:
    """Largest multiple-of-128 divisor of flat_len whose (B, TILE) x-block stays
    under ~target_bytes (lane-dense stores; VMEM-safe on v7x with 2x buffering)."""
    max_elems = max(128, target_bytes // max(1, batch * itemsize))
    fitting, all_mult = [], []
    for cand in range(128, flat_len + 1, 128):
        if flat_len % cand == 0:
            all_mult.append(cand)
            if cand <= max_elems:
                fitting.append(cand)
    if fitting:
        return fitting[-1]
    if all_mult:
        return all_mult[0]
    return flat_len  # no 128-multiple divisor: single full-width block


# ----------------------------------------------------------------------------
# Wrapper (equivalent to PositionalEncoding.forward)
# ----------------------------------------------------------------------------
def positional_encoding_forward(x, P, *, dropout_rate: float, key=None):
    """x: (B, S, H); P: (1, max_len, H).  Returns dropout(x + P[:, :S, :])."""
    B, S, H = x.shape
    _, max_len, Hp = P.shape
    if Hp != H:
        raise ValueError(f"P hidden dim {Hp} != x hidden dim {H}")
    if S > max_len:
        raise ValueError(f"seq_len {S} exceeds positional table max_len {max_len}")
    if not (0.0 <= dropout_rate < 1.0):
        raise ValueError("dropout_rate must be in [0, 1)")

    flat = S * H
    itemsize = jnp.dtype(x.dtype).itemsize
    tile = _choose_flat_tile(flat, B, itemsize)
    n_tiles = flat // tile

    x2 = x.reshape(B, flat)
    if tile % 128 == 0:
        # No wrapper slice/copy of P: the BlockSpec windows into the full table.
        p2 = P.reshape(1, max_len * H)
    else:
        # Fallback (tile == flat, not a multiple of 128): lane dim must equal the
        # full array dim, so slice P to the used window.
        p2 = P[:, :S, :].reshape(1, flat)

    idx = lambda f: (0, f)
    in_specs = [
        pl.BlockSpec((B, tile), idx),   # X
        pl.BlockSpec((1, tile), idx),   # P (broadcast over batch inside kernel)
    ]
    args = [x2, p2]

    bytes_accessed = 2 * B * flat * itemsize + flat * 4  # x read + out write + P read
    if dropout_rate > 0.0:
        if key is None:
            key = jax.random.PRNGKey(0)
        # TODO(synk): replace with pltpu.prng_random_bits inside the kernel on a
        # TPU-only path (no interpret-mode lowering exists for the HW PRNG).
        u = jax.random.uniform(key, (B, flat), dtype=jnp.float32)
        in_specs.append(pl.BlockSpec((B, tile), idx))
        args.append(u)
        bytes_accessed += B * flat * 4
        kernel = functools.partial(_add_pe_dropout_kernel,
                                   dropout_rate=float(dropout_rate))
    else:
        kernel = _add_pe_kernel

    out = pl.pallas_call(
        kernel,
        out_shape=jax.ShapeDtypeStruct((B, flat), x.dtype),
        grid=(n_tiles,),
        in_specs=in_specs,
        out_specs=pl.BlockSpec((B, tile), idx),
        compiler_params=pltpu.CompilerParams(
            dimension_semantics=("parallel",),   # independent tiles: shard across TCs
        ),
        cost_estimate=pl.CostEstimate(
            flops=B * flat, transcendentals=0, bytes_accessed=int(bytes_accessed)),
    )(*args)
    return out.reshape(B, S, H)


# ----------------------------------------------------------------------------
# Demo / self-check
# ----------------------------------------------------------------------------
if __name__ == "__main__":
    batch, seq, num_hiddens = 2, 8, 32
    max_len = 1000
    dropout = 0.1

    key = jax.random.PRNGKey(0)
    kx, kd = jax.random.split(key)
    x = jax.random.normal(kx, (batch, seq, num_hiddens), dtype=jnp.float32)

    P = make_positional_table(num_hiddens, max_len)
    ref = x + P[:, :seq, :]

    # 1) dropout = 0.0: must match X + P exactly (eval-mode semantics).
    out_nodrop = jax.block_until_ready(
        positional_encoding_forward(x, P, dropout_rate=0.0))
    assert out_nodrop.shape == x.shape and out_nodrop.dtype == x.dtype
    assert jnp.allclose(out_nodrop, ref, atol=1e-6, rtol=1e-6), "mismatch vs reference add"

    # 2) dropout = 0.1: training-mode forward.  Stream differs from torch's RNG,
    #    but semantics match: kept elements == ref/(1-p), dropped elements == 0.
    out_drop = jax.block_until_ready(
        positional_encoding_forward(x, P, dropout_rate=dropout, key=kd))
    assert out_drop.shape == x.shape and out_drop.dtype == x.dtype
    scaled_ref = ref / (1.0 - dropout)
    close_to_scaled = jnp.isclose(out_drop, scaled_ref, atol=1e-5, rtol=1e-5)
    is_zero = out_drop == 0.0
    assert bool(jnp.all(close_to_scaled | is_zero)), "dropout output inconsistent"

    print("KERNEL_OK")
</pallas_src>

<mosaic_0001>
module attributes {stable_mosaic.version = 11 : i64} {
  func.func @_add_pe_kernel(%arg0: i32, %arg1: memref<2x256xf32, #tpu.memory_space<vmem>>, %arg2: memref<1x256xf32, #tpu.memory_space<vmem>>, %arg3: memref<2x256xf32, #tpu.memory_space<vmem>>) attributes {dimension_semantics = [#tpu.dimension_semantics<parallel>], iteration_bounds = array<i64: 1>, scalar_prefetch = 0 : i64, scratch_operands = 0 : i64, tpu.core_type = #tpu.core_type<tc>, window_params = [{transform_indices = @transform_0, window_bounds = array<i64: 2, 256>}, {transform_indices = @transform_1, window_bounds = array<i64: 1, 256>}, {transform_indices = @transform_2, window_bounds = array<i64: 2, 256>}]} {
    %c0 = arith.constant 0 : index
    %c0_0 = arith.constant 0 : index
    %0 = vector.load %arg1[%c0, %c0_0] : memref<2x256xf32, #tpu.memory_space<vmem>>, vector<2x256xf32>
    %c0_1 = arith.constant 0 : index
    %c0_2 = arith.constant 0 : index
    %1 = vector.load %arg2[%c0_1, %c0_2] : memref<1x256xf32, #tpu.memory_space<vmem>>, vector<1x256xf32>
    %2 = vector.broadcast %1 : vector<1x256xf32> to vector<2x256xf32>
    %3 = arith.addf %0, %2 : vector<2x256xf32>
    %c0_3 = arith.constant 0 : index
    %c0_4 = arith.constant 0 : index
    %4 = vector.load %arg3[%c0_3, %c0_4] : memref<2x256xf32, #tpu.memory_space<vmem>>, vector<2x256xf32>
    tpu.vector_store %arg3[%c0_3, %c0_4], %3 {strides = array<i32>} : memref<2x256xf32, #tpu.memory_space<vmem>>, vector<2x256xf32>,
    return
  }
  func.func @transform_0(%arg0: i32) -> (i32, i32) {
    %c0_i32 = arith.constant 0 : i32
    %c0_i32_0 = arith.constant 0 : i32
    return %c0_i32, %arg0 : i32, i32
  }
  func.func @transform_1(%arg0: i32) -> (i32, i32) {
    %c0_i32 = arith.constant 0 : i32
    %c0_i32_0 = arith.constant 0 : i32
    return %c0_i32, %arg0 : i32, i32
  }
  func.func @transform_2(%arg0: i32) -> (i32, i32) {
    %c0_i32 = arith.constant 0 : i32
    %c0_i32_0 = arith.constant 0 : i32
    return %c0_i32, %arg0 : i32, i32
  }
}

</mosaic_0001>

<llo_original>
// kernel: tpu_custom_call.1
$region0: #{tpu_custom_call.1}
  #allocation0 [shape = 'u32[]', space=smem, size = 0x4, offset = 0x4, fixed_abs, tag = 'smem constant byte address 0x4 - core index']
  #allocation1 [shape = 'u32[72,128]{1,0:T(1,128)}', space=vmem, size = 0x9000, scoped, tag = 'internal scratch']
  %s0 = inlined_call_operand.hbm [shape: f32[2,256], index: 0, kind: input, shape index: {}]
  %s1 = inlined_call_operand.hbm [shape: f32[1,32000], index: 1, kind: input, shape index: {}]
  %s2 = inlined_call_operand.hbm [shape: f32[2,256], index: 2, kind: output, shape index: {}]
  %s3 = sld [smem:[#allocation0]]
  $region26: #{tpu_custom_call.1} parent=0
    _
  %s5 = ssub.s32 1, %s3
  %s6 = scalar_select 0, %s5, %s3
  $region1: #{tpu_custom_call.1} parent=0
    #allocation2 [shape = 'u8[2048]{0}', space=vmem, size = 0x800, scoped, tag = 'input window, operand 0, single buffered']
    #allocation3 [shape = 's32[1]{0}', space=sflag, size = 0x4, scoped, tag = 'scoped memory for tpu_custom_call.1']
    #allocation4 [shape = 's32[1]{0}', space=sflag, size = 0x4, scoped, tag = 'scoped memory for tpu_custom_call.1']
    #allocation5 [shape = 'u8[1024]{0}', space=vmem, size = 0x400, scoped, tag = 'input window, operand 1, single buffered']
    #allocation6 [shape = 's32[1]{0}', space=sflag, size = 0x4, scoped, tag = 'scoped memory for tpu_custom_call.1']
    #allocation7 [shape = 'u8[2048]{0}', space=vmem, size = 0x800, scoped, tag = 'output window, operand 0, single buffered']
    %7 = vsyncpa [#allocation3], 0
    %8 = vsyncpa [#allocation6], 0
    %9 = vsyncpa [#allocation4], 0
    // Predicated region
    $region2: #{tpu_custom_call.1} parent=1 // pred_check
      _
    $region3: #{tpu_custom_call.1} parent=1 // pred_check_branch
      %11 = sbr.rel (0) target = $region5
    $region4: #{tpu_custom_call.1} parent=1 // pred_region
      %13 = vsyncadd [#allocation3], 0
      %s15 = sshll.u32 %s0, 4
      %s16 = int_to_ptr.hbm [resolvable:$true] %s15
      %s17 = sshll.u32 [#allocation2], 4
      %s18 = int_to_ptr.vmem [resolvable:$true] %s17
      %20 = dma.hbm_to_vmem [thread:$0]  %s16, 64, %s18, [#allocation3]
    $region5: #{tpu_custom_call.1} parent=1 // pred_fallthru
      _
    // Predicated region
    $region6: #{tpu_custom_call.1} parent=1 // pred_check
      _
    $region7: #{tpu_custom_call.1} parent=1 // pred_check_branch
      %22 = sbr.rel (0) target = $region9
    $region8: #{tpu_custom_call.1} parent=1 // pred_region
      %24 = vsyncadd [#allocation6], 0
      %s26 = sshll.u32 %s1, 4
      %s27 = int_to_ptr.hbm [resolvable:$true] %s26
      %s28 = sshll.u32 [#allocation5], 4
      %s29 = int_to_ptr.vmem [resolvable:$true] %s28
      %31 = dma.hbm_to_vmem [thread:$0]  %s27, 32, %s29, [#allocation6]
    $region9: #{tpu_custom_call.1} parent=1 // pred_fallthru
      _
    // Predicated region
    $region10: #{tpu_custom_call.1} parent=1 // pred_check
      _
    $region11: #{tpu_custom_call.1} parent=1 // pred_check_branch
      %33 = sbr.rel (0) target = $region13
    $region12: #{tpu_custom_call.1} parent=1 // pred_region
      %35 = dma.done [#allocation3], 64
    $region13: #{tpu_custom_call.1} parent=1 // pred_fallthru
      _
    // Predicated region
    $region14: #{tpu_custom_call.1} parent=1 // pred_check
      _
    $region15: #{tpu_custom_call.1} parent=1 // pred_check_branch
      %37 = sbr.rel (0) target = $region17
    $region16: #{tpu_custom_call.1} parent=1 // pred_region
      %39 = dma.done [#allocation6], 32
    $region17: #{tpu_custom_call.1} parent=1 // pred_fallthru
      _
    %v40 = vld [vmem:[#allocation2] sm:$0xf]
    %v41 = vld [vmem:[#allocation5] sm:$0x3]
    %v43 = vperm.slane %v41, 0
    %v44 = vperm.slane %v41, 1
    %v45 = vrot.slane %v44, 6
    %vm46 = vcmask 1041408
    %v47 = vsel %vm46, %v43, %v45
    %v49 = vadd.f32 %v40, %v47
    %50 = vst [vmem:[#allocation7] sm:$0xf] %v49
    // Predicated region
    $region18: #{tpu_custom_call.1} parent=1 // pred_check
      _
    $region19: #{tpu_custom_call.1} parent=1 // pred_check_branch
      %52 = sbr.rel (0) target = $region21
    $region20: #{tpu_custom_call.1} parent=1 // pred_region
      %54 = vsyncadd [#allocation4], 0
      %s56 = sshll.u32 [#allocation7], 4
      %s57 = int_to_ptr.vmem [resolvable:$true] %s56
      %s58 = sshll.u32 %s2, 4
      %s59 = int_to_ptr.hbm [resolvable:$true] %s58
      %61 = dma.vmem_to_hbm [thread:$0]  %s57, 64, %s59, [#allocation4]
    $region21: #{tpu_custom_call.1} parent=1 // pred_fallthru
      _
    // Predicated region
    $region22: #{tpu_custom_call.1} parent=1 // pred_check
      _
    $region23: #{tpu_custom_call.1} parent=1 // pred_check_branch
      %63 = sbr.rel (0) target = $region25
    $region24: #{tpu_custom_call.1} parent=1 // pred_region
      %65 = dma.done [#allocation4], 64
    $region25: #{tpu_custom_call.1} parent=1 // pred_fallthru
      _
    %66 = vsyncpa [#allocation3], 1
    %67 = vsyncpa [#allocation6], 1
    %68 = vsyncpa [#allocation4], 1

</llo_original>
